<compile_context>
chip_gen: v6e
topology: v6e:2x2x1
jax: 0.10.0
libtpu: 0.0.40
codegen_flags: <defaults>
</compile_context>

<pallas_src>
import jax
import jax.numpy as jnp
from jax.experimental import pallas as pl
from jax.experimental.pallas import tpu as pltpu


def gate_kernel(xh_ref, w_ref, b_ref, o_ref):
    # xh_ref: (tm, K)   w_ref: (K, tn)   b_ref: (1, tn)   o_ref: (tm, tn)
    # Single MXU matmul with fp32 accumulation, bias add on the VPU,
    # lane-dense store (tn is a multiple of 128).
    acc = jnp.dot(xh_ref[...], w_ref[...], preferred_element_type=jnp.float32)
    o_ref[...] = (acc + b_ref[...]).astype(o_ref.dtype)


def prepare_gate_params(weight, bias, compute_dtype=None):
    """One-time parameter preprocessing (hoisted out of the forward pass).

    weight: (output_size, input_size + output_size)  -- nn.Linear layout
    bias:   (output_size,)
    Returns (w_t, b2d, output_size):
      w_t : (K, N_pad) pre-transposed weight, N padded to a multiple of 128
      b2d : (1, N_pad) fp32 bias row (kept fp32: added to the fp32 accumulator)
    """
    output_size, K = weight.shape
    n_pad = ((output_size + 127) // 128) * 128
    w_t = jnp.transpose(weight)                         # (K, output_size)
    b = bias.astype(jnp.float32)
    if n_pad != output_size:
        w_t = jnp.pad(w_t, ((0, 0), (0, n_pad - output_size)))
        b = jnp.pad(b, (0, n_pad - output_size))
    if compute_dtype is not None:
        w_t = w_t.astype(compute_dtype)                 # e.g. bf16 on v6e/v7x
    return w_t, b.reshape(1, n_pad), output_size


def gate_forward(x, h, w_t, b2d, output_size, *, tm=256, tn=512):
    """Pallas Gate.forward(x, h) with pre-prepared parameters.

    x:   (B, input_size)
    h:   (B, output_size)
    w_t: (K, N_pad)  from prepare_gate_params
    b2d: (1, N_pad)  from prepare_gate_params
    returns (B, output_size) in x.dtype
    """
    B = x.shape[0]
    K, n_pad = w_t.shape
    assert x.shape[1] + h.shape[1] == K

    # concat([x, h], dim=1) once in plain JAX glue; the kernel then runs a
    # single fused matmul instead of two padded tiny ones.
    xh = jnp.concatenate([x, h], axis=1).astype(w_t.dtype)   # (B, K)

    # Tile sizes: the batch block either tiles B or equals the full B (legal
    # even when B is not a multiple of 8); tn is a multiple of 128 (N_pad
    # already is) for lane-dense output stores.
    tm = B if B < tm else tm
    tn = n_pad if n_pad < tn else tn

    grid = (pl.cdiv(B, tm), pl.cdiv(n_pad, tn))
    out = pl.pallas_call(
        gate_kernel,
        out_shape=jax.ShapeDtypeStruct((B, n_pad), x.dtype),
        grid_spec=pltpu.PrefetchScalarGridSpec(
            num_scalar_prefetch=0,
            grid=grid,
            in_specs=[
                # Activations stream over the batch grid axis.
                pl.BlockSpec((tm, K), lambda i, j: (i, 0)),
                # Weight / bias blocks are constant in i -> stay VMEM-resident
                # across batch tiles.
                pl.BlockSpec((K, tn), lambda i, j: (0, j)),
                pl.BlockSpec((1, tn), lambda i, j: (0, j)),
            ],
            out_specs=pl.BlockSpec((tm, tn), lambda i, j: (i, j)),
        ),
        compiler_params=pltpu.CompilerParams(
            # No reduction axis in the grid: both axes parallel -> megacore /
            # v7x 2-TC sharding.
            dimension_semantics=("parallel", "parallel"),
            # Explicit VMEM budget so the tiling is portable to v7x (64 MiB).
            vmem_limit_bytes=32 * 1024 * 1024,
        ),
    )(xh, w_t, b2d)

    # Drop the lane padding (no-op when output_size is a multiple of 128).
    return out[:, :output_size] if n_pad != output_size else out


if __name__ == "__main__":
    # Small shapes consistent with the module: Gate(input_size, output_size)
    batch = 8
    input_size = 16
    output_size = 32

    key = jax.random.PRNGKey(0)
    kx, kh, kw, kb = jax.random.split(key, 4)

    # Deterministic parameter init (mimic nn.Linear default U(-1/sqrt(fan_in), +1/sqrt(fan_in)))
    fan_in = input_size + output_size
    bound = 1.0 / jnp.sqrt(jnp.float32(fan_in))
    weight = jax.random.uniform(kw, (output_size, fan_in), jnp.float32, -bound, bound)
    bias = jax.random.uniform(kb, (output_size,), jnp.float32, -bound, bound)

    x = jax.random.normal(kx, (batch, input_size), jnp.float32)
    h = jax.random.normal(kh, (batch, output_size), jnp.float32)

    # Reference: concat then Linear (identical semantics to the PyTorch module).
    ref = jnp.concatenate([x, h], axis=1) @ weight.T + bias

    # --- fp32 path (tight tolerance) ---
    w_t, b2d, n_out = prepare_gate_params(weight, bias)          # done once
    out = gate_forward(x, h, w_t, b2d, n_out)
    out = jax.block_until_ready(out)
    assert out.shape == (batch, output_size)
    assert jnp.allclose(out, ref, atol=1e-5, rtol=1e-5), "fp32 mismatch vs reference"

    # --- bf16 MXU-input path (v6e/v7x recommendation), fp32 accumulation ---
    w_t16, b2d16, _ = prepare_gate_params(weight, bias, compute_dtype=jnp.bfloat16)
    out16 = gate_forward(x, h, w_t16, b2d16, n_out)
    out16 = jax.block_until_ready(out16)
    assert jnp.allclose(out16.astype(jnp.float32), ref, atol=5e-2, rtol=5e-2), \
        "bf16 mismatch vs reference"

    print("KERNEL_OK")
</pallas_src>

<mosaic_0001>
module attributes {stable_mosaic.version = 11 : i64} {
  func.func @gate_kernel(%arg0: i32, %arg1: i32, %arg2: memref<8x48xf32, #tpu.memory_space<vmem>>, %arg3: memref<48x128xf32, #tpu.memory_space<vmem>>, %arg4: memref<1x128xf32, #tpu.memory_space<vmem>>, %arg5: memref<8x128xf32, #tpu.memory_space<vmem>>) attributes {dimension_semantics = [#tpu.dimension_semantics<parallel>, #tpu.dimension_semantics<parallel>], iteration_bounds = array<i64: 1, 1>, scalar_prefetch = 0 : i64, scratch_operands = 0 : i64, tpu.core_type = #tpu.core_type<tc>, window_params = [{transform_indices = @transform_0, window_bounds = array<i64: 8, 48>}, {transform_indices = @transform_1, window_bounds = array<i64: 48, 128>}, {transform_indices = @transform_2, window_bounds = array<i64: 1, 128>}, {transform_indices = @transform_3, window_bounds = array<i64: 8, 128>}]} {
    %c0 = arith.constant 0 : index
    %c0_0 = arith.constant 0 : index
    %0 = vector.load %arg2[%c0, %c0_0] : memref<8x48xf32, #tpu.memory_space<vmem>>, vector<8x48xf32>
    %c0_1 = arith.constant 0 : index
    %c0_2 = arith.constant 0 : index
    %1 = vector.load %arg3[%c0_1, %c0_2] : memref<48x128xf32, #tpu.memory_space<vmem>>, vector<48x128xf32>
    %cst = arith.constant dense<0.000000e+00> : vector<8x128xf32>
    %2 = tpu.matmul %0, %1, %cst {dimension_numbers = #tpu.dot_dimension_numbers<[1], [0], [0], [1], [0, 0, 1, 1], [], []>} : vector<8x48xf32>, vector<48x128xf32>, vector<8x128xf32> -> vector<8x128xf32>
    %c0_3 = arith.constant 0 : index
    %c0_4 = arith.constant 0 : index
    %3 = vector.load %arg4[%c0_3, %c0_4] : memref<1x128xf32, #tpu.memory_space<vmem>>, vector<1x128xf32>
    %4 = vector.broadcast %3 : vector<1x128xf32> to vector<8x128xf32>
    %5 = arith.addf %2, %4 : vector<8x128xf32>
    %c0_5 = arith.constant 0 : index
    %c0_6 = arith.constant 0 : index
    %6 = vector.load %arg5[%c0_5, %c0_6] : memref<8x128xf32, #tpu.memory_space<vmem>>, vector<8x128xf32>
    tpu.vector_store %arg5[%c0_5, %c0_6], %5 {strides = array<i32>} : memref<8x128xf32, #tpu.memory_space<vmem>>, vector<8x128xf32>,
    return
  }
  func.func @transform_0(%arg0: i32, %arg1: i32) -> (i32, i32) {
    %c0_i32 = arith.constant 0 : i32
    %c0_i32_0 = arith.constant 0 : i32
    return %arg0, %c0_i32 : i32, i32
  }
  func.func @transform_1(%arg0: i32, %arg1: i32) -> (i32, i32) {
    %c0_i32 = arith.constant 0 : i32
    %c0_i32_0 = arith.constant 0 : i32
    return %c0_i32, %arg1 : i32, i32
  }
  func.func @transform_2(%arg0: i32, %arg1: i32) -> (i32, i32) {
    %c0_i32 = arith.constant 0 : i32
    %c0_i32_0 = arith.constant 0 : i32
    return %c0_i32, %arg1 : i32, i32
  }
  func.func @transform_3(%arg0: i32, %arg1: i32) -> (i32, i32) {
    %c0_i32 = arith.constant 0 : i32
    return %arg0, %arg1 : i32, i32
  }
}

</mosaic_0001>

<llo_original>
// kernel: tpu_custom_call.1
$region0: #{tpu_custom_call.1}
  #allocation0 [shape = 'u32[]', space=smem, size = 0x4, offset = 0x4, fixed_abs, tag = 'smem constant byte address 0x4 - core index']
  #allocation1 [shape = 'u32[144,128]{1,0:T(1,128)}', space=vmem, size = 0x12000, scoped, tag = 'internal scratch']
  %s0 = inlined_call_operand.hbm [shape: f32[8,48], index: 0, kind: input, shape index: {}]
  %s1 = inlined_call_operand.hbm [shape: f32[48,128], index: 1, kind: input, shape index: {}]
  %s2 = inlined_call_operand.vmem [shape: f32[1,128], index: 2, kind: input, shape index: {}]
  %s3 = inlined_call_operand.hbm [shape: f32[8,128], index: 3, kind: output, shape index: {}]
  %s4 = sld [smem:[#allocation0]]
  $region30: #{tpu_custom_call.1} parent=0
    _
  %s6 = ssub.s32 1, %s4
  %s7 = scalar_select 0, %s6, %s4
  $region1: #{tpu_custom_call.1} parent=0
    #allocation2 [shape = 'u8[4096]{0}', space=vmem, size = 0x1000, scoped, tag = 'input window, operand 0, single buffered']
    #allocation3 [shape = 's32[1]{0}', space=sflag, size = 0x4, scoped, tag = 'scoped memory for tpu_custom_call.1']
    #allocation4 [shape = 's32[1]{0}', space=sflag, size = 0x4, scoped, tag = 'scoped memory for tpu_custom_call.1']
    #allocation5 [shape = 'u8[24576]{0}', space=vmem, size = 0x6000, scoped, tag = 'input window, operand 1, single buffered']
    #allocation6 [shape = 's32[1]{0}', space=sflag, size = 0x4, scoped, tag = 'scoped memory for tpu_custom_call.1']
    #allocation7 [shape = 'u8[4096]{0}', space=vmem, size = 0x1000, scoped, tag = 'output window, operand 0, single buffered']
    %8 = vsyncpa [#allocation3], 0
    %9 = vsyncpa [#allocation6], 0
    %10 = vsyncpa [#allocation4], 0
    // Predicated region
    $region2: #{tpu_custom_call.1} parent=1 // pred_check
      _
    $region3: #{tpu_custom_call.1} parent=1 // pred_check_branch
      %12 = sbr.rel (0) target = $region5
    $region4: #{tpu_custom_call.1} parent=1 // pred_region
      %s14 = ssub.s32 128, 128
      %15 = vsyncadd [#allocation3], %s14
      %s17 = sshll.u32 [#allocation2], 4
      %s18 = int_to_ptr.vmem [resolvable:$true] %s17
      %20 = dma.hbm_to_vmem [thread:$0]  %s0, 128, %s18, [#allocation3]
    $region5: #{tpu_custom_call.1} parent=1 // pred_fallthru
      _
    // Predicated region
    $region6: #{tpu_custom_call.1} parent=1 // pred_check
      _
    $region7: #{tpu_custom_call.1} parent=1 // pred_check_branch
      %22 = sbr.rel (0) target = $region9
    $region8: #{tpu_custom_call.1} parent=1 // pred_region
      %s24 = ssub.s32 768, 768
      %25 = vsyncadd [#allocation6], %s24
      %s26 = sshll.u32 [#allocation5], 4
      %s27 = int_to_ptr.vmem [resolvable:$true] %s26
      %32 = dma.hbm_to_vmem [thread:$0]  %s1, 768, %s27, [#allocation6], 128, 128, 8
    $region9: #{tpu_custom_call.1} parent=1 // pred_fallthru
      _
    // Predicated region
    $region10: #{tpu_custom_call.1} parent=1 // pred_check
      _
    $region11: #{tpu_custom_call.1} parent=1 // pred_check_branch
      %34 = sbr.rel (0) target = $region13
    $region12: #{tpu_custom_call.1} parent=1 // pred_region
      _
    $region13: #{tpu_custom_call.1} parent=1 // pred_fallthru
      _
    // Predicated region
    $region14: #{tpu_custom_call.1} parent=1 // pred_check
      _
    $region15: #{tpu_custom_call.1} parent=1 // pred_check_branch
      %36 = sbr.rel (0) target = $region17
    $region16: #{tpu_custom_call.1} parent=1 // pred_region
      %37 = dma.done [#allocation3], 128
    $region17: #{tpu_custom_call.1} parent=1 // pred_fallthru
      _
    // Predicated region
    $region18: #{tpu_custom_call.1} parent=1 // pred_check
      _
    $region19: #{tpu_custom_call.1} parent=1 // pred_check_branch
      %39 = sbr.rel (0) target = $region21
    $region20: #{tpu_custom_call.1} parent=1 // pred_region
      %40 = dma.done [#allocation6], 768
    $region21: #{tpu_custom_call.1} parent=1 // pred_fallthru
      _
    %v41 = vld [vmem:[#allocation2] sm:$0xff]
    %v42 = vld [vmem:[#allocation5] sm:$0xff]
    %v43 = vld [vmem:[#allocation5 + $0x8] sm:$0xff]
    %v44 = vld [vmem:[#allocation5 + $0x10] sm:$0xff]
    %v45 = vld [vmem:[#allocation5 + $0x18] sm:$0xff]
    %v46 = vld [vmem:[#allocation5 + $0x20] sm:$0xff]
    %v47 = vld [vmem:[#allocation5 + $0x28] sm:$0xff]
    %v48 = vld [vmem:[%s2] sm:$0x1]
    %v50 = vlaneseq
    %v51 = vshrl.u32 %v50, 7
    %v52 = vsub.s32 0, %v51
    %v53 = vrot.slane %v48, %v52
    %vm55 = vcmask 392192
    %v57 = vsel %vm55, %v41, 0
    %59 = vmatprep.subr.mxu0 0.0
    %60 = vmatpush1.msra.mxu0 0.0
    %61 = vmatprep.subr.mxu0 0.0
    %62 = vmatpush1.msra.mxu0 0.0
    %63 = vmatprep.subr.mxu0 0.0
    %64 = vmatpush1.msra.mxu0 0.0
    %65 = vmatprep.subr.mxu0 0.0
    %66 = vmatpush1.msra.mxu0 0.0
    %67 = vmatprep.subr.mxu0 0.0
    %68 = vmatpush1.msra.mxu0 0.0
    %69 = vmatprep.subr.mxu0 0.0
    %70 = vmatpush1.msra.mxu0 0.0
    %71 = vmatprep.subr.mxu0 0.0
    %72 = vmatpush1.msra.mxu0 0.0
    %73 = vmatprep.subr.mxu0 0.0
    %74 = vmatpush1.msra.mxu0 0.0
    %75 = vmatprep.subr.mxu0 0.0
    %76 = vmatpush1.msra.mxu0 0.0
    %77 = vmatprep.subr.mxu0 0.0
    %78 = vmatpush1.msra.mxu0 0.0
    %79 = vmatprep.subr.mxu0 0.0
    %80 = vmatpush1.msra.mxu0 %v47
    %81 = vmatprep.subr.mxu0 0.0
    %82 = vmatpush1.msra.mxu0 %v46
    %83 = vmatprep.subr.mxu0 0.0
    %84 = vmatpush1.msra.mxu0 %v45
    %85 = vmatprep.subr.mxu0 0.0
    %86 = vmatpush1.msra.mxu0 %v44
    %87 = vmatprep.subr.mxu0 0.0
    %88 = vmatpush1.msra.mxu0 %v43
    %89 = vmatprep.subr.mxu0 0.0
    %90 = vmatpush1.msra.mxu0 %v42
    %91 = vmatprep.subr.mxu0 0.0
    %92 = vmatpush2.msra.mxu0 0.0
    %93 = vmatprep.subr.mxu0 0.0
    %94 = vmatpush2.msra.mxu0 0.0
    %95 = vmatprep.subr.mxu0 0.0
    %96 = vmatpush2.msra.mxu0 0.0
    %97 = vmatprep.subr.mxu0 0.0
    %98 = vmatpush2.msra.mxu0 0.0
    %99 = vmatprep.subr.mxu0 0.0
    %100 = vmatpush2.msra.mxu0 0.0
    %101 = vmatprep.subr.mxu0 0.0
    %102 = vmatpush2.msra.mxu0 0.0
    %103 = vmatprep.subr.mxu0 0.0
    %104 = vmatpush2.msra.mxu0 0.0
    %105 = vmatprep.subr.mxu0 0.0
    %106 = vmatpush2.msra.mxu0 0.0
    %107 = vmatprep.subr.mxu0 0.0
    %108 = vmatpush2.msra.mxu0 0.0
    %109 = vmatprep.subr.mxu0 0.0
    %110 = vmatpush2.msra.mxu0 0.0
    %111 = vmatprep.subr.mxu0 0.0
    %112 = vmatpush2.msra.mxu0 0.0
    %113 = vmatprep.subr.mxu0 0.0
    %114 = vmatpush2.msra.mxu0 0.0
    %115 = vmatprep.subr.mxu0 0.0
    %116 = vmatpush2.msra.mxu0 0.0
    %117 = vmatprep.subr.mxu0 0.0
    %118 = vmatpush2.msra.mxu0 0.0
    %119 = vmatprep.subr.mxu0 0.0
    %120 = vmatpush2.msra.mxu0 0.0
    %121 = vmatprep.subr.mxu0 0.0
    %122 = vmatpush2.msra.mxu0 0.0
    %123 = vmatprep.mubr.f32.mxu0 0.0
    %124 = vmatmul.mubr.f32.gmra.mxu0 %v57
    %v125 = vpop.f32.mrf.mxu0
    %v126 = vadd.f32 %v53, %v125
    %v127 = vpop.f32.mrf.mxu0
    %128 = vdwg.mxu0
    %129 = vst [vmem:[#allocation7] sm:$0xff] %v126
    // Predicated region
    $region22: #{tpu_custom_call.1} parent=1 // pred_check
      _
    $region23: #{tpu_custom_call.1} parent=1 // pred_check_branch
      %131 = sbr.rel (0) target = $region25
    $region24: #{tpu_custom_call.1} parent=1 // pred_region
      %s133 = ssub.s32 128, 128
      %134 = vsyncadd [#allocation4], %s133
      %s136 = sshll.u32 [#allocation7], 4
      %s137 = int_to_ptr.vmem [resolvable:$true] %s136
      %139 = dma.vmem_to_hbm [thread:$0]  %s137, 128, %s3, [#allocation4]
    $region25: #{tpu_custom_call.1} parent=1 // pred_fallthru
      _
    // Predicated region
    $region26: #{tpu_custom_call.1} parent=1 // pred_check
      _
    $region27: #{tpu_custom_call.1} parent=1 // pred_check_branch
      %141 = sbr.rel (0) target = $region29
    $region28: #{tpu_custom_call.1} parent=1 // pred_region
      %142 = dma.done [#allocation4], 128
    $region29: #{tpu_custom_call.1} parent=1 // pred_fallthru
      _
    %143 = vsyncpa [#allocation3], 1
    %144 = vsyncpa [#allocation6], 1
    %145 = vsyncpa [#allocation4], 1

</llo_original>
